<compile_context>
chip_gen: v7x
topology: tpu7x:2x2x1
jax: 0.10.0
libtpu: 0.0.40
codegen_flags: <defaults>
</compile_context>

<pallas_src>
import jax
import jax.numpy as jnp
from jax.experimental import pallas as pl
from jax.experimental.pallas import tpu as pltpu

LANE = 128                    # lane width
SUBLANE = 8                   # f32 sublane count
GRANULE = LANE * SUBLANE      # 1024: batch granularity keeping blocks tile-dense
HIDDEN = 8


def mlp_kernel(p_ref, x_ref, o_ref):
    """Fused Linear(2,8) + ReLU + Linear(8,1) on dense (rows, 128) batch tiles.

    p_ref : (33,) f32 in SMEM, packed parameters:
              p[0:8]   = w1[0, :]   (weights on feature 0, per hidden unit)
              p[8:16]  = w1[1, :]   (weights on feature 1)
              p[16:24] = b1
              p[24:32] = w2[:, 0]
              p[32]    = b2
    x_ref : (2, rows, 128) f32 VMEM  (feature-major, batch dense on sublanes x lanes)
    o_ref : (rows, 128)    f32 VMEM  (batch dense, lane-dense stores)
    """
    x0 = x_ref[0]                                  # (rows, 128) feature 0
    x1 = x_ref[1]                                  # (rows, 128) feature 1

    acc = None
    for j in range(HIDDEN):                        # unrolled: 8 hidden units
        h = jnp.maximum(
            p_ref[j] * x0 + p_ref[HIDDEN + j] * x1 + p_ref[2 * HIDDEN + j],
            0.0)
        term = p_ref[3 * HIDDEN + j] * h
        acc = term if acc is None else acc + term
    o_ref[...] = (acc + p_ref[4 * HIDDEN]).astype(o_ref.dtype)


def _round_up(n, m):
    return ((n + m - 1) // m) * m


def _cdiv(a, b):
    return (a + b - 1) // b


def my_neural_net(x, w1, b1, w2, b2, *, tile_b=256 * 1024):
    """Forward pass of MyNeuralNet.

    x  : [B, 2] float32
    w1 : [2, 8], b1 : [1, 8]   (layer1, stored as [in, out])
    w2 : [8, 1], b2 : [1, 1]   (layer2, stored as [in, out])
    returns [B, 1] float32
    """
    B = x.shape[0]
    assert x.shape[1] == 2

    # ---- tile sizing -----------------------------------------------------
    # Blocks stay (8,128)-dense: batch tile is a multiple of 1024 rows.
    # Cap at half the rounded batch so the grid has >= 2 "parallel" steps
    # (megacore) as soon as the batch is big enough, and at 1M rows so the
    # double-buffered working set (24 B/row) stays well inside scoped VMEM
    # on every generation (v5e/v6e/v7x).
    half = _round_up(_cdiv(B, 2), GRANULE)
    tb = min(int(tile_b), half, 1 << 20)
    tb = max(GRANULE, (tb // GRANULE) * GRANULE)
    n_tiles = _cdiv(B, tb)
    Bp = n_tiles * tb
    tbr = tb // LANE                      # sublane-rows per tile (multiple of 8)

    # ---- layout plumbing (single pass; pad only when needed) --------------
    xt = x.astype(jnp.float32).T          # (2, B): one fused XLA transpose pass
    if Bp != B:
        xt = jnp.pad(xt, ((0, 0), (0, Bp - B)))
    x3 = xt.reshape(2, Bp // LANE, LANE)  # free (contiguous reshape)

    # Pack all parameters into one SMEM vector (19 useful scalars).
    params = jnp.concatenate([
        w1[0, :].reshape(-1), w1[1, :].reshape(-1),
        b1.reshape(-1), w2.reshape(-1), b2.reshape(-1),
    ]).astype(jnp.float32)                # (33,)

    out = pl.pallas_call(
        mlp_kernel,
        out_shape=jax.ShapeDtypeStruct((Bp // LANE, LANE), jnp.float32),
        grid_spec=pltpu.PrefetchScalarGridSpec(
            num_scalar_prefetch=0,
            grid=(n_tiles,),
            in_specs=[
                pl.BlockSpec(memory_space=pltpu.MemorySpace.SMEM),   # params
                pl.BlockSpec((2, tbr, LANE), lambda i: (0, i, 0)),   # x tile
            ],
            out_specs=pl.BlockSpec((tbr, LANE), lambda i: (i, 0)),
        ),
        compiler_params=pltpu.CompilerParams(
            dimension_semantics=("parallel",),        # megacore sharding
            vmem_limit_bytes=32 * 1024 * 1024,        # headroom vs v5e 16 MiB default
        ),
    )(params, x3)

    y = out.reshape(Bp)                   # free (contiguous reshape)
    if Bp != B:
        y = y[:B]                         # only copies when padding occurred
    return y.reshape(B, 1)                # free


def init_params(key):
    # Deterministic init mimicking nn.Linear's uniform(-1/sqrt(fan_in), 1/sqrt(fan_in)).
    k1, k2, k3, k4 = jax.random.split(key, 4)
    bound1 = 1.0 / jnp.sqrt(2.0)
    bound2 = 1.0 / jnp.sqrt(8.0)
    w1 = jax.random.uniform(k1, (2, 8), jnp.float32, -bound1, bound1)   # [in, out]
    b1 = jax.random.uniform(k2, (1, 8), jnp.float32, -bound1, bound1)
    w2 = jax.random.uniform(k3, (8, 1), jnp.float32, -bound2, bound2)   # [in, out]
    b2 = jax.random.uniform(k4, (1, 1), jnp.float32, -bound2, bound2)
    return w1, b1, w2, b2


if __name__ == "__main__":
    key = jax.random.PRNGKey(0)
    w1, b1, w2, b2 = init_params(key)

    def ref_forward(xs):
        return jnp.maximum(xs @ w1 + b1, 0.0) @ w2 + b2

    # Same data as the PyTorch script: x = [[1,2],[3,4],[5,6],[7,8]]
    x_small = jnp.array([[1.0, 2.0], [3.0, 4.0], [5.0, 6.0], [7.0, 8.0]],
                        dtype=jnp.float32)                     # [4, 2]
    out_small = jax.block_until_ready(my_neural_net(x_small, w1, b1, w2, b2))
    assert out_small.shape == (4, 1)
    assert jnp.allclose(out_small, ref_forward(x_small), atol=1e-5), (
        out_small, ref_forward(x_small))

    # Multi-tile / megacore path: 2 grid steps, no padding, no output slice.
    x_big = jax.random.normal(jax.random.PRNGKey(1), (4096, 2), jnp.float32)
    out_big = jax.block_until_ready(
        my_neural_net(x_big, w1, b1, w2, b2, tile_b=2048))
    assert out_big.shape == (4096, 1)
    assert jnp.allclose(out_big, ref_forward(x_big), atol=1e-4)

    # Ragged batch exercising the padded-tail + output-slice path.
    x_rag = jax.random.normal(jax.random.PRNGKey(2), (3000, 2), jnp.float32)
    out_rag = jax.block_until_ready(
        my_neural_net(x_rag, w1, b1, w2, b2, tile_b=2048))
    assert out_rag.shape == (3000, 1)
    assert jnp.allclose(out_rag, ref_forward(x_rag), atol=1e-4)

    # TODO(synk): Dataset/DataLoader/SGD training loop from the original script
    # is host-side training plumbing, not part of the module forward pass.
    print("KERNEL_OK")
</pallas_src>

<mosaic_0001>
module attributes {stable_mosaic.version = 11 : i64} {
  func.func @mlp_kernel(%arg0: i32, %arg1: memref<33xf32, #tpu.memory_space<smem>>, %arg2: memref<2x8x128xf32, #tpu.memory_space<vmem>>, %arg3: memref<8x128xf32, #tpu.memory_space<vmem>>) attributes {dimension_semantics = [#tpu.dimension_semantics<parallel>], iteration_bounds = array<i64: 1>, scalar_prefetch = 0 : i64, scratch_operands = 0 : i64, tpu.core_type = #tpu.core_type<tc>, window_params = [{transform_indices = @transform_0, window_bounds = array<i64: 33>}, {transform_indices = @transform_1, window_bounds = array<i64: 2, 8, 128>}, {transform_indices = @transform_2, window_bounds = array<i64: 8, 128>}]} {
    %c0 = arith.constant 0 : index
    %c0_0 = arith.constant 0 : index
    %c0_1 = arith.constant 0 : index
    %0 = vector.load %arg2[%c0, %c0_0, %c0_1] : memref<2x8x128xf32, #tpu.memory_space<vmem>>, vector<1x8x128xf32>
    %1 = vector.shape_cast %0 : vector<1x8x128xf32> to vector<8x128xf32>
    %c1 = arith.constant 1 : index
    %c0_2 = arith.constant 0 : index
    %c0_3 = arith.constant 0 : index
    %2 = vector.load %arg2[%c1, %c0_2, %c0_3] : memref<2x8x128xf32, #tpu.memory_space<vmem>>, vector<1x8x128xf32>
    %3 = vector.shape_cast %2 : vector<1x8x128xf32> to vector<8x128xf32>
    %c0_4 = arith.constant 0 : index
    %4 = memref.load %arg1[%c0_4] : memref<33xf32, #tpu.memory_space<smem>>
    %5 = vector.broadcast %4 : f32 to vector<8x128xf32>
    %6 = arith.mulf %5, %1 : vector<8x128xf32>
    %c8 = arith.constant 8 : index
    %7 = memref.load %arg1[%c8] : memref<33xf32, #tpu.memory_space<smem>>
    %8 = vector.broadcast %7 : f32 to vector<8x128xf32>
    %9 = arith.mulf %8, %3 : vector<8x128xf32>
    %10 = arith.addf %6, %9 : vector<8x128xf32>
    %c16 = arith.constant 16 : index
    %11 = memref.load %arg1[%c16] : memref<33xf32, #tpu.memory_space<smem>>
    %12 = vector.broadcast %11 : f32 to vector<8x128xf32>
    %13 = arith.addf %10, %12 : vector<8x128xf32>
    %cst = arith.constant 0.000000e+00 : f32
    %14 = vector.broadcast %cst : f32 to vector<8x128xf32>
    %15 = arith.maximumf %13, %14 : vector<8x128xf32>
    %c24 = arith.constant 24 : index
    %16 = memref.load %arg1[%c24] : memref<33xf32, #tpu.memory_space<smem>>
    %17 = vector.broadcast %16 : f32 to vector<8x128xf32>
    %18 = arith.mulf %17, %15 : vector<8x128xf32>
    %c1_5 = arith.constant 1 : index
    %19 = memref.load %arg1[%c1_5] : memref<33xf32, #tpu.memory_space<smem>>
    %20 = vector.broadcast %19 : f32 to vector<8x128xf32>
    %21 = arith.mulf %20, %1 : vector<8x128xf32>
    %c9 = arith.constant 9 : index
    %22 = memref.load %arg1[%c9] : memref<33xf32, #tpu.memory_space<smem>>
    %23 = vector.broadcast %22 : f32 to vector<8x128xf32>
    %24 = arith.mulf %23, %3 : vector<8x128xf32>
    %25 = arith.addf %21, %24 : vector<8x128xf32>
    %c17 = arith.constant 17 : index
    %26 = memref.load %arg1[%c17] : memref<33xf32, #tpu.memory_space<smem>>
    %27 = vector.broadcast %26 : f32 to vector<8x128xf32>
    %28 = arith.addf %25, %27 : vector<8x128xf32>
    %cst_6 = arith.constant 0.000000e+00 : f32
    %29 = vector.broadcast %cst_6 : f32 to vector<8x128xf32>
    %30 = arith.maximumf %28, %29 : vector<8x128xf32>
    %c25 = arith.constant 25 : index
    %31 = memref.load %arg1[%c25] : memref<33xf32, #tpu.memory_space<smem>>
    %32 = vector.broadcast %31 : f32 to vector<8x128xf32>
    %33 = arith.mulf %32, %30 : vector<8x128xf32>
    %34 = arith.addf %18, %33 : vector<8x128xf32>
    %c2 = arith.constant 2 : index
    %35 = memref.load %arg1[%c2] : memref<33xf32, #tpu.memory_space<smem>>
    %36 = vector.broadcast %35 : f32 to vector<8x128xf32>
    %37 = arith.mulf %36, %1 : vector<8x128xf32>
    %c10 = arith.constant 10 : index
    %38 = memref.load %arg1[%c10] : memref<33xf32, #tpu.memory_space<smem>>
    %39 = vector.broadcast %38 : f32 to vector<8x128xf32>
    %40 = arith.mulf %39, %3 : vector<8x128xf32>
    %41 = arith.addf %37, %40 : vector<8x128xf32>
    %c18 = arith.constant 18 : index
    %42 = memref.load %arg1[%c18] : memref<33xf32, #tpu.memory_space<smem>>
    %43 = vector.broadcast %42 : f32 to vector<8x128xf32>
    %44 = arith.addf %41, %43 : vector<8x128xf32>
    %cst_7 = arith.constant 0.000000e+00 : f32
    %45 = vector.broadcast %cst_7 : f32 to vector<8x128xf32>
    %46 = arith.maximumf %44, %45 : vector<8x128xf32>
    %c26 = arith.constant 26 : index
    %47 = memref.load %arg1[%c26] : memref<33xf32, #tpu.memory_space<smem>>
    %48 = vector.broadcast %47 : f32 to vector<8x128xf32>
    %49 = arith.mulf %48, %46 : vector<8x128xf32>
    %50 = arith.addf %34, %49 : vector<8x128xf32>
    %c3 = arith.constant 3 : index
    %51 = memref.load %arg1[%c3] : memref<33xf32, #tpu.memory_space<smem>>
    %52 = vector.broadcast %51 : f32 to vector<8x128xf32>
    %53 = arith.mulf %52, %1 : vector<8x128xf32>
    %c11 = arith.constant 11 : index
    %54 = memref.load %arg1[%c11] : memref<33xf32, #tpu.memory_space<smem>>
    %55 = vector.broadcast %54 : f32 to vector<8x128xf32>
    %56 = arith.mulf %55, %3 : vector<8x128xf32>
    %57 = arith.addf %53, %56 : vector<8x128xf32>
    %c19 = arith.constant 19 : index
    %58 = memref.load %arg1[%c19] : memref<33xf32, #tpu.memory_space<smem>>
    %59 = vector.broadcast %58 : f32 to vector<8x128xf32>
    %60 = arith.addf %57, %59 : vector<8x128xf32>
    %cst_8 = arith.constant 0.000000e+00 : f32
    %61 = vector.broadcast %cst_8 : f32 to vector<8x128xf32>
    %62 = arith.maximumf %60, %61 : vector<8x128xf32>
    %c27 = arith.constant 27 : index
    %63 = memref.load %arg1[%c27] : memref<33xf32, #tpu.memory_space<smem>>
    %64 = vector.broadcast %63 : f32 to vector<8x128xf32>
    %65 = arith.mulf %64, %62 : vector<8x128xf32>
    %66 = arith.addf %50, %65 : vector<8x128xf32>
    %c4 = arith.constant 4 : index
    %67 = memref.load %arg1[%c4] : memref<33xf32, #tpu.memory_space<smem>>
    %68 = vector.broadcast %67 : f32 to vector<8x128xf32>
    %69 = arith.mulf %68, %1 : vector<8x128xf32>
    %c12 = arith.constant 12 : index
    %70 = memref.load %arg1[%c12] : memref<33xf32, #tpu.memory_space<smem>>
    %71 = vector.broadcast %70 : f32 to vector<8x128xf32>
    %72 = arith.mulf %71, %3 : vector<8x128xf32>
    %73 = arith.addf %69, %72 : vector<8x128xf32>
    %c20 = arith.constant 20 : index
    %74 = memref.load %arg1[%c20] : memref<33xf32, #tpu.memory_space<smem>>
    %75 = vector.broadcast %74 : f32 to vector<8x128xf32>
    %76 = arith.addf %73, %75 : vector<8x128xf32>
    %cst_9 = arith.constant 0.000000e+00 : f32
    %77 = vector.broadcast %cst_9 : f32 to vector<8x128xf32>
    %78 = arith.maximumf %76, %77 : vector<8x128xf32>
    %c28 = arith.constant 28 : index
    %79 = memref.load %arg1[%c28] : memref<33xf32, #tpu.memory_space<smem>>
    %80 = vector.broadcast %79 : f32 to vector<8x128xf32>
    %81 = arith.mulf %80, %78 : vector<8x128xf32>
    %82 = arith.addf %66, %81 : vector<8x128xf32>
    %c5 = arith.constant 5 : index
    %83 = memref.load %arg1[%c5] : memref<33xf32, #tpu.memory_space<smem>>
    %84 = vector.broadcast %83 : f32 to vector<8x128xf32>
    %85 = arith.mulf %84, %1 : vector<8x128xf32>
    %c13 = arith.constant 13 : index
    %86 = memref.load %arg1[%c13] : memref<33xf32, #tpu.memory_space<smem>>
    %87 = vector.broadcast %86 : f32 to vector<8x128xf32>
    %88 = arith.mulf %87, %3 : vector<8x128xf32>
    %89 = arith.addf %85, %88 : vector<8x128xf32>
    %c21 = arith.constant 21 : index
    %90 = memref.load %arg1[%c21] : memref<33xf32, #tpu.memory_space<smem>>
    %91 = vector.broadcast %90 : f32 to vector<8x128xf32>
    %92 = arith.addf %89, %91 : vector<8x128xf32>
    %cst_10 = arith.constant 0.000000e+00 : f32
    %93 = vector.broadcast %cst_10 : f32 to vector<8x128xf32>
    %94 = arith.maximumf %92, %93 : vector<8x128xf32>
    %c29 = arith.constant 29 : index
    %95 = memref.load %arg1[%c29] : memref<33xf32, #tpu.memory_space<smem>>
    %96 = vector.broadcast %95 : f32 to vector<8x128xf32>
    %97 = arith.mulf %96, %94 : vector<8x128xf32>
    %98 = arith.addf %82, %97 : vector<8x128xf32>
    %c6 = arith.constant 6 : index
    %99 = memref.load %arg1[%c6] : memref<33xf32, #tpu.memory_space<smem>>
    %100 = vector.broadcast %99 : f32 to vector<8x128xf32>
    %101 = arith.mulf %100, %1 : vector<8x128xf32>
    %c14 = arith.constant 14 : index
    %102 = memref.load %arg1[%c14] : memref<33xf32, #tpu.memory_space<smem>>
    %103 = vector.broadcast %102 : f32 to vector<8x128xf32>
    %104 = arith.mulf %103, %3 : vector<8x128xf32>
    %105 = arith.addf %101, %104 : vector<8x128xf32>
    %c22 = arith.constant 22 : index
    %106 = memref.load %arg1[%c22] : memref<33xf32, #tpu.memory_space<smem>>
    %107 = vector.broadcast %106 : f32 to vector<8x128xf32>
    %108 = arith.addf %105, %107 : vector<8x128xf32>
    %cst_11 = arith.constant 0.000000e+00 : f32
    %109 = vector.broadcast %cst_11 : f32 to vector<8x128xf32>
    %110 = arith.maximumf %108, %109 : vector<8x128xf32>
    %c30 = arith.constant 30 : index
    %111 = memref.load %arg1[%c30] : memref<33xf32, #tpu.memory_space<smem>>
    %112 = vector.broadcast %111 : f32 to vector<8x128xf32>
    %113 = arith.mulf %112, %110 : vector<8x128xf32>
    %114 = arith.addf %98, %113 : vector<8x128xf32>
    %c7 = arith.constant 7 : index
    %115 = memref.load %arg1[%c7] : memref<33xf32, #tpu.memory_space<smem>>
    %116 = vector.broadcast %115 : f32 to vector<8x128xf32>
    %117 = arith.mulf %116, %1 : vector<8x128xf32>
    %c15 = arith.constant 15 : index
    %118 = memref.load %arg1[%c15] : memref<33xf32, #tpu.memory_space<smem>>
    %119 = vector.broadcast %118 : f32 to vector<8x128xf32>
    %120 = arith.mulf %119, %3 : vector<8x128xf32>
    %121 = arith.addf %117, %120 : vector<8x128xf32>
    %c23 = arith.constant 23 : index
    %122 = memref.load %arg1[%c23] : memref<33xf32, #tpu.memory_space<smem>>
    %123 = vector.broadcast %122 : f32 to vector<8x128xf32>
    %124 = arith.addf %121, %123 : vector<8x128xf32>
    %cst_12 = arith.constant 0.000000e+00 : f32
    %125 = vector.broadcast %cst_12 : f32 to vector<8x128xf32>
    %126 = arith.maximumf %124, %125 : vector<8x128xf32>
    %c31 = arith.constant 31 : index
    %127 = memref.load %arg1[%c31] : memref<33xf32, #tpu.memory_space<smem>>
    %128 = vector.broadcast %127 : f32 to vector<8x128xf32>
    %129 = arith.mulf %128, %126 : vector<8x128xf32>
    %130 = arith.addf %114, %129 : vector<8x128xf32>
    %c32 = arith.constant 32 : index
    %131 = memref.load %arg1[%c32] : memref<33xf32, #tpu.memory_space<smem>>
    %132 = vector.broadcast %131 : f32 to vector<8x128xf32>
    %133 = arith.addf %130, %132 : vector<8x128xf32>
    %c0_13 = arith.constant 0 : index
    %c0_14 = arith.constant 0 : index
    %134 = vector.load %arg3[%c0_13, %c0_14] : memref<8x128xf32, #tpu.memory_space<vmem>>, vector<8x128xf32>
    tpu.vector_store %arg3[%c0_13, %c0_14], %133 {strides = array<i32>} : memref<8x128xf32, #tpu.memory_space<vmem>>, vector<8x128xf32>,
    return
  }
  func.func @transform_0(%arg0: i32) -> i32 {
    %c0_i32 = arith.constant 0 : i32
    %c0_i32_0 = arith.constant 0 : i32
    return %c0_i32 : i32
  }
  func.func @transform_1(%arg0: i32) -> (i32, i32, i32) {
    %c0_i32 = arith.constant 0 : i32
    %c0_i32_0 = arith.constant 0 : i32
    %c0_i32_1 = arith.constant 0 : i32
    return %c0_i32, %arg0, %c0_i32_0 : i32, i32, i32
  }
  func.func @transform_2(%arg0: i32) -> (i32, i32) {
    %c0_i32 = arith.constant 0 : i32
    %c0_i32_0 = arith.constant 0 : i32
    return %arg0, %c0_i32 : i32, i32
  }
}

</mosaic_0001>

<llo_original>
// kernel: tpu_custom_call.1
$region0: #{tpu_custom_call.1}
  #allocation0 [shape = 'u32[]', space=smem, size = 0x4, offset = 0x4, fixed_abs, tag = 'smem constant byte address 0x4 - core index']
  #allocation1 [shape = 'u32[144,128]{1,0:T(1,128)}', space=vmem, size = 0x12000, scoped, tag = 'internal scratch']
  %s0 = inlined_call_operand.hbm [shape: f32[33], index: 0, kind: input, shape index: {}]
  %s1 = inlined_call_operand.hbm [shape: f32[2,8,128], index: 1, kind: input, shape index: {}]
  %s2 = inlined_call_operand.hbm [shape: f32[8,128], index: 2, kind: output, shape index: {}]
  %s3 = sld [smem:[#allocation0]]
  $region26: #{tpu_custom_call.1} parent=0
    _
  %s5 = ssub.s32 1, %s3
  %s6 = scalar_select 0, %s5, %s3
  $region1: #{tpu_custom_call.1} parent=0
    #allocation2 [shape = 'u8[512]{0}', space=smem, size = 0x200, scoped, tag = 'input window, operand 0, single buffered']
    #allocation3 [shape = 's32[1]{0}', space=sflag, size = 0x4, scoped, tag = 'scoped memory for tpu_custom_call.1']
    #allocation4 [shape = 's32[1]{0}', space=sflag, size = 0x4, scoped, tag = 'scoped memory for tpu_custom_call.1']
    #allocation5 [shape = 's32[1]{0}', space=sflag, size = 0x4, scoped, tag = 'scoped memory for tpu_custom_call.1']
    #allocation6 [shape = 'u8[8192]{0}', space=vmem, size = 0x2000, scoped, tag = 'input window, operand 1, single buffered']
    #allocation7 [shape = 'u8[4096]{0}', space=vmem, size = 0x1000, scoped, tag = 'output window, operand 0, single buffered']
    %7 = vsyncpa [#allocation5], 0
    %8 = vsyncpa [#allocation3], 0
    %9 = vsyncpa [#allocation4], 0
    // Predicated region
    $region2: #{tpu_custom_call.1} parent=1 // pred_check
      _
    $region3: #{tpu_custom_call.1} parent=1 // pred_check_branch
      %11 = sbr.rel (0) target = $region5
    $region4: #{tpu_custom_call.1} parent=1 // pred_region
      %s13 = ssub.s32 16, 16
      %14 = vsyncadd [#allocation5], %s13
      %17 = dma.hbm_to_smem %s0, 16, [#allocation2], [#allocation5]
    $region5: #{tpu_custom_call.1} parent=1 // pred_fallthru
      _
    // Predicated region
    $region6: #{tpu_custom_call.1} parent=1 // pred_check
      _
    $region7: #{tpu_custom_call.1} parent=1 // pred_check_branch
      %19 = sbr.rel (0) target = $region9
    $region8: #{tpu_custom_call.1} parent=1 // pred_region
      %s21 = ssub.s32 256, 256
      %22 = vsyncadd [#allocation3], %s21
      %s23 = sshll.u32 [#allocation6], 4
      %s24 = int_to_ptr.vmem [resolvable:$true] %s23
      %29 = dma.hbm_to_vmem [thread:$0]  %s1, 256, %s24, [#allocation3], 128, 128, 8
    $region9: #{tpu_custom_call.1} parent=1 // pred_fallthru
      _
    // Predicated region
    $region10: #{tpu_custom_call.1} parent=1 // pred_check
      _
    $region11: #{tpu_custom_call.1} parent=1 // pred_check_branch
      %31 = sbr.rel (0) target = $region13
    $region12: #{tpu_custom_call.1} parent=1 // pred_region
      %32 = dma.done [#allocation5], 16
    $region13: #{tpu_custom_call.1} parent=1 // pred_fallthru
      _
    // Predicated region
    $region14: #{tpu_custom_call.1} parent=1 // pred_check
      _
    $region15: #{tpu_custom_call.1} parent=1 // pred_check_branch
      %34 = sbr.rel (0) target = $region17
    $region16: #{tpu_custom_call.1} parent=1 // pred_region
      %35 = dma.done [#allocation3], 256
    $region17: #{tpu_custom_call.1} parent=1 // pred_fallthru
      _
    %36 = sfence
    %v37 = vld [vmem:[#allocation6] sm:$0xff]
    %s38 = scalar_lea.vmem [#allocation6], 8
    %v39 = vld [vmem:[%s38] sm:$0xff]
    %s40 = sld [smem:[#allocation2]]
    %v41 = vstv %s40
    %v42 = vmul.f32 %v41, %v37
    %s43 = sld [smem:[#allocation2 + $0x8]]
    %v44 = vstv %s43
    %v45 = vmul.f32 %v44, %v39
    %v46 = vadd.f32 %v42, %v45
    %s47 = sld [smem:[#allocation2 + $0x10]]
    %v48 = vstv %s47
    %v49 = vadd.f32 %v46, %v48
    %v50 = vmax.f32 %v49, 0.0
    %s51 = sld [smem:[#allocation2 + $0x18]]
    %v52 = vstv %s51
    %v53 = vmul.f32 %v52, %v50
    %s54 = sld [smem:[#allocation2 + $0x1]]
    %v55 = vstv %s54
    %v56 = vmul.f32 %v55, %v37
    %s57 = sld [smem:[#allocation2 + $0x9]]
    %v58 = vstv %s57
    %v59 = vmul.f32 %v58, %v39
    %v60 = vadd.f32 %v56, %v59
    %s61 = sld [smem:[#allocation2 + $0x11]]
    %v62 = vstv %s61
    %v63 = vadd.f32 %v60, %v62
    %v64 = vmax.f32 %v63, 0.0
    %s65 = sld [smem:[#allocation2 + $0x19]]
    %v66 = vstv %s65
    %v67 = vmul.f32 %v66, %v64
    %v68 = vadd.f32 %v53, %v67
    %s69 = sld [smem:[#allocation2 + $0x2]]
    %v70 = vstv %s69
    %v71 = vmul.f32 %v70, %v37
    %s72 = sld [smem:[#allocation2 + $0xa]]
    %v73 = vstv %s72
    %v74 = vmul.f32 %v73, %v39
    %v75 = vadd.f32 %v71, %v74
    %s76 = sld [smem:[#allocation2 + $0x12]]
    %v77 = vstv %s76
    %v78 = vadd.f32 %v75, %v77
    %v79 = vmax.f32 %v78, 0.0
    %s80 = sld [smem:[#allocation2 + $0x1a]]
    %v81 = vstv %s80
    %v82 = vmul.f32 %v81, %v79
    %v83 = vadd.f32 %v68, %v82
    %s84 = sld [smem:[#allocation2 + $0x3]]
    %v85 = vstv %s84
    %v86 = vmul.f32 %v85, %v37
    %s87 = sld [smem:[#allocation2 + $0xb]]
    %v88 = vstv %s87
    %v89 = vmul.f32 %v88, %v39
    %v90 = vadd.f32 %v86, %v89
    %s91 = sld [smem:[#allocation2 + $0x13]]
    %v92 = vstv %s91
    %v93 = vadd.f32 %v90, %v92
    %v94 = vmax.f32 %v93, 0.0
    %s95 = sld [smem:[#allocation2 + $0x1b]]
    %v96 = vstv %s95
    %v97 = vmul.f32 %v96, %v94
    %v98 = vadd.f32 %v83, %v97
    %s99 = sld [smem:[#allocation2 + $0x4]]
    %v100 = vstv %s99
    %v101 = vmul.f32 %v100, %v37
    %s102 = sld [smem:[#allocation2 + $0xc]]
    %v103 = vstv %s102
    %v104 = vmul.f32 %v103, %v39
    %v105 = vadd.f32 %v101, %v104
    %s106 = sld [smem:[#allocation2 + $0x14]]
    %v107 = vstv %s106
    %v108 = vadd.f32 %v105, %v107
    %v109 = vmax.f32 %v108, 0.0
    %s110 = sld [smem:[#allocation2 + $0x1c]]
    %v111 = vstv %s110
    %v112 = vmul.f32 %v111, %v109
    %v113 = vadd.f32 %v98, %v112
    %s114 = sld [smem:[#allocation2 + $0x5]]
    %v115 = vstv %s114
    %v116 = vmul.f32 %v115, %v37
    %s117 = sld [smem:[#allocation2 + $0xd]]
    %v118 = vstv %s117
    %v119 = vmul.f32 %v118, %v39
    %v120 = vadd.f32 %v116, %v119
    %s121 = sld [smem:[#allocation2 + $0x15]]
    %v122 = vstv %s121
    %v123 = vadd.f32 %v120, %v122
    %v124 = vmax.f32 %v123, 0.0
    %s125 = sld [smem:[#allocation2 + $0x1d]]
    %v126 = vstv %s125
    %v127 = vmul.f32 %v126, %v124
    %v128 = vadd.f32 %v113, %v127
    %s129 = sld [smem:[#allocation2 + $0x6]]
    %v130 = vstv %s129
    %v131 = vmul.f32 %v130, %v37
    %s132 = sld [smem:[#allocation2 + $0xe]]
    %v133 = vstv %s132
    %v134 = vmul.f32 %v133, %v39
    %v135 = vadd.f32 %v131, %v134
    %s136 = sld [smem:[#allocation2 + $0x16]]
    %v137 = vstv %s136
    %v138 = vadd.f32 %v135, %v137
    %v139 = vmax.f32 %v138, 0.0
    %s140 = sld [smem:[#allocation2 + $0x1e]]
    %v141 = vstv %s140
    %v142 = vmul.f32 %v141, %v139
    %v143 = vadd.f32 %v128, %v142
    %s144 = sld [smem:[#allocation2 + $0x7]]
    %v145 = vstv %s144
    %v146 = vmul.f32 %v145, %v37
    %s147 = sld [smem:[#allocation2 + $0xf]]
    %v148 = vstv %s147
    %v149 = vmul.f32 %v148, %v39
    %v150 = vadd.f32 %v146, %v149
    %s151 = sld [smem:[#allocation2 + $0x17]]
    %v152 = vstv %s151
    %v153 = vadd.f32 %v150, %v152
    %v154 = vmax.f32 %v153, 0.0
    %s155 = sld [smem:[#allocation2 + $0x1f]]
    %v156 = vstv %s155
    %v157 = vmul.f32 %v156, %v154
    %v158 = vadd.f32 %v143, %v157
    %s159 = sld [smem:[#allocation2 + $0x20]]
    %v160 = vstv %s159
    %v161 = vadd.f32 %v158, %v160
    %162 = vst [vmem:[#allocation7] sm:$0xff] %v161
    // Predicated region
    $region18: #{tpu_custom_call.1} parent=1 // pred_check
      _
    $region19: #{tpu_custom_call.1} parent=1 // pred_check_branch
      %164 = sbr.rel (0) target = $region21
    $region20: #{tpu_custom_call.1} parent=1 // pred_region
      %s166 = ssub.s32 128, 128
      %167 = vsyncadd [#allocation4], %s166
      %s169 = sshll.u32 [#allocation7], 4
      %s170 = int_to_ptr.vmem [resolvable:$true] %s169
      %172 = dma.vmem_to_hbm [thread:$0]  %s170, 128, %s2, [#allocation4]
    $region21: #{tpu_custom_call.1} parent=1 // pred_fallthru
      _
    // Predicated region
    $region22: #{tpu_custom_call.1} parent=1 // pred_check
      _
    $region23: #{tpu_custom_call.1} parent=1 // pred_check_branch
      %174 = sbr.rel (0) target = $region25
    $region24: #{tpu_custom_call.1} parent=1 // pred_region
      %175 = dma.done [#allocation4], 128
    $region25: #{tpu_custom_call.1} parent=1 // pred_fallthru
      _
    %176 = vsyncpa [#allocation3], 1
    %177 = vsyncpa [#allocation4], 1
    %178 = vsyncpa [#allocation5], 1

</llo_original>
